<compile_context>
chip_gen: v7x
topology: tpu7x:2x2x1
jax: 0.10.0
libtpu: 0.0.40
codegen_flags: <defaults>
</compile_context>

<pallas_src>
import jax
import jax.numpy as jnp
from jax.experimental import pallas as pl
from jax.experimental.pallas import tpu as pltpu


def _round_up(x, m):
    return ((x + m - 1) // m) * m


def _mlp_kernel(x_ref, w1_ref, b1_ref, w2_ref, b2_ref, w3_ref, b3_ref, o_ref):
    # x arrives at its true (unpadded) feature width; cast to bf16 for the MXU.
    x = x_ref[...].astype(jnp.bfloat16)

    # fc1 + relu  (bf16 MXU inputs, f32 accumulation / elementwise)
    h1 = jnp.dot(x, w1_ref[...], preferred_element_type=jnp.float32)
    h1 = jnp.maximum(h1 + b1_ref[...], 0.0)

    # fc2 + relu
    h2 = jnp.dot(h1.astype(jnp.bfloat16), w2_ref[...],
                 preferred_element_type=jnp.float32)
    h2 = jnp.maximum(h2 + b2_ref[...], 0.0)

    # fc3 over the real output columns only (no activation).
    out = jnp.dot(h2.astype(jnp.bfloat16), w3_ref[...],
                  preferred_element_type=jnp.float32)
    o_ref[...] = (out + b3_ref[...]).astype(o_ref.dtype)


def prepare_params(params):
    """One-time weight/bias padding + bf16 cast (hoisted out of the forward)."""
    w1t, b1 = params["w1t"], params["b1"]
    w2t, b2 = params["w2t"], params["b2"]
    w3t, b3 = params["w3t"], params["b3"]

    n_in, h1 = w1t.shape
    h2 = w2t.shape[1]
    n_out = w3t.shape[1]
    h1_p = _round_up(h1, 128)   # 50  -> 128 (lane-dense intermediate h1)
    h2_p = _round_up(h2, 128)   # 200 -> 256 (lane-dense intermediate h2)

    def pad_w(w, rows, cols):
        out = jnp.zeros((rows, cols), jnp.bfloat16)
        return out.at[:w.shape[0], :w.shape[1]].set(w.astype(jnp.bfloat16))

    def pad_b(b, cols):
        out = jnp.zeros((1, cols), jnp.float32)
        return out.at[:, :b.shape[1]].set(b.astype(jnp.float32))

    return {
        "n_in": n_in, "n_out": n_out, "h1": h1, "h2": h2,
        # K of fc1 stays at the true input width (x is not lane-padded).
        "w1": pad_w(w1t, n_in, h1_p), "b1": pad_b(b1, h1_p),
        "w2": pad_w(w2t, h1_p, h2_p), "b2": pad_b(b2, h2_p),
        # fc3 output columns stay at the true width (no 8x padded writeback).
        "w3": pad_w(w3t, h2_p, n_out), "b3": pad_b(b3, n_out),
    }


def mlp_forward(x, prep, *, tile_b=1024):
    """x: (B, n_input) float32. prep: output of prepare_params()."""
    B, n_in = x.shape
    assert n_in == prep["n_in"], (n_in, prep["n_in"])
    n_out = prep["n_out"]

    # Grid sizing: minimal batch padding, no forced multi-step grid.
    #   * B <= tile_b  -> single step (optimal on 1-TC v5e/v6e, fine on v7x).
    #   * B  > tile_b  -> grid splits naturally, giving v7x both cores work.
    n_steps = max(1, -(-B // tile_b))
    tile = _round_up(-(-B // n_steps), 8)        # sublane-aligned rows
    B_p = n_steps * tile
    xp = x if B_p == B else jnp.pad(x, ((0, B_p - B), (0, 0)))

    w1, b1 = prep["w1"], prep["b1"]
    w2, b2 = prep["w2"], prep["b2"]
    w3, b3 = prep["w3"], prep["b3"]

    # Weights/biases: full-array, grid-invariant blocks (fetched once).
    full = lambda a: pl.BlockSpec(a.shape, lambda i: (0, 0))

    # Advisory cost estimate: real flops and real (unpadded) I/O bytes.
    flops = 2 * B * (n_in * prep["h1"] + prep["h1"] * prep["h2"]
                     + prep["h2"] * n_out)
    bytes_accessed = int(
        xp.size * xp.dtype.itemsize + B_p * n_out * 4
        + sum(a.size * a.dtype.itemsize for a in (w1, b1, w2, b2, w3, b3)))

    out = pl.pallas_call(
        _mlp_kernel,
        out_shape=jax.ShapeDtypeStruct((B_p, n_out), jnp.float32),
        grid_spec=pltpu.PrefetchScalarGridSpec(
            num_scalar_prefetch=0,
            grid=(n_steps,),
            in_specs=[
                pl.BlockSpec((tile, n_in), lambda i: (i, 0)),
                full(w1), full(b1),
                full(w2), full(b2),
                full(w3), full(b3),
            ],
            out_specs=pl.BlockSpec((tile, n_out), lambda i: (i, 0)),
        ),
        compiler_params=pltpu.CompilerParams(
            dimension_semantics=("parallel",),
        ),
        cost_estimate=pl.CostEstimate(
            flops=int(flops), transcendentals=0,
            bytes_accessed=bytes_accessed),
    )(xp, w1, b1, w2, b2, w3, b3)

    return out if B_p == B else out[:B]


def init_params(key, n_input, n_output):
    """Deterministic init mimicking torch.nn.Linear default (uniform +-1/sqrt(fan_in))."""
    dims = [(n_input, 50), (50, 200), (200, n_output)]
    names = [("w1t", "b1"), ("w2t", "b2"), ("w3t", "b3")]
    params = {}
    for (fan_in, fan_out), (wn, bn) in zip(dims, names):
        key, kw, kb = jax.random.split(key, 3)
        bound = 1.0 / jnp.sqrt(jnp.float32(fan_in))
        # stored transposed: (in, out)
        params[wn] = jax.random.uniform(
            kw, (fan_in, fan_out), jnp.float32, -bound, bound)
        params[bn] = jax.random.uniform(
            kb, (1, fan_out), jnp.float32, -bound, bound)
    return params


def reference_forward(x, params):
    h1 = jnp.maximum(x @ params["w1t"] + params["b1"], 0.0)
    h2 = jnp.maximum(h1 @ params["w2t"] + params["b2"], 0.0)
    return h2 @ params["w3t"] + params["b3"]


if __name__ == "__main__":
    n_input, n_output = 32, 16
    batch = 8

    key = jax.random.PRNGKey(0)
    key, kx = jax.random.split(key)
    x = jax.random.normal(kx, (batch, n_input), jnp.float32)
    params = init_params(key, n_input, n_output)

    prep = prepare_params(params)          # one-time weight pad/cast (hoisted)

    out = mlp_forward(x, prep)
    out = jax.block_until_ready(out)

    ref = reference_forward(x, params)     # f32 reference
    assert out.shape == (batch, n_output)
    # bf16 matmul inputs with f32 accumulation -> relaxed tolerance vs f32 ref.
    assert jnp.allclose(out, ref, atol=5e-2, rtol=5e-2), (
        f"max abs err {jnp.max(jnp.abs(out - ref))}")

    print("KERNEL_OK")
</pallas_src>

<mosaic_0001>
module attributes {stable_mosaic.version = 11 : i64} {
  func.func @_mlp_kernel(%arg0: i32, %arg1: memref<8x32xf32, #tpu.memory_space<vmem>>, %arg2: memref<32x128xbf16, #tpu.memory_space<vmem>>, %arg3: memref<1x128xf32, #tpu.memory_space<vmem>>, %arg4: memref<128x256xbf16, #tpu.memory_space<vmem>>, %arg5: memref<1x256xf32, #tpu.memory_space<vmem>>, %arg6: memref<256x16xbf16, #tpu.memory_space<vmem>>, %arg7: memref<1x16xf32, #tpu.memory_space<vmem>>, %arg8: memref<8x16xf32, #tpu.memory_space<vmem>>) attributes {dimension_semantics = [#tpu.dimension_semantics<parallel>], iteration_bounds = array<i64: 1>, scalar_prefetch = 0 : i64, scratch_operands = 0 : i64, tpu.core_type = #tpu.core_type<tc>, window_params = [{transform_indices = @transform_0, window_bounds = array<i64: 8, 32>}, {pipeline_mode = #tpu.pipeline_mode<synchronous>, transform_indices = @transform_1, window_bounds = array<i64: 32, 128>}, {pipeline_mode = #tpu.pipeline_mode<synchronous>, transform_indices = @transform_2, window_bounds = array<i64: 1, 128>}, {pipeline_mode = #tpu.pipeline_mode<synchronous>, transform_indices = @transform_3, window_bounds = array<i64: 128, 256>}, {pipeline_mode = #tpu.pipeline_mode<synchronous>, transform_indices = @transform_4, window_bounds = array<i64: 1, 256>}, {pipeline_mode = #tpu.pipeline_mode<synchronous>, transform_indices = @transform_5, window_bounds = array<i64: 256, 16>}, {pipeline_mode = #tpu.pipeline_mode<synchronous>, transform_indices = @transform_6, window_bounds = array<i64: 1, 16>}, {transform_indices = @transform_7, window_bounds = array<i64: 8, 16>}]} {
    %c0 = arith.constant 0 : index
    %c0_0 = arith.constant 0 : index
    %0 = vector.load %arg1[%c0, %c0_0] : memref<8x32xf32, #tpu.memory_space<vmem>>, vector<8x32xf32>
    %1 = arith.truncf %0 : vector<8x32xf32> to vector<8x32xbf16>
    %c0_1 = arith.constant 0 : index
    %c0_2 = arith.constant 0 : index
    %2 = vector.load %arg2[%c0_1, %c0_2] : memref<32x128xbf16, #tpu.memory_space<vmem>>, vector<32x128xbf16>
    %cst = arith.constant dense<0.000000e+00> : vector<8x128xf32>
    %3 = tpu.matmul %1, %2, %cst {dimension_numbers = #tpu.dot_dimension_numbers<[1], [0], [0], [1], [0, 0, 1, 1], [], []>} : vector<8x32xbf16>, vector<32x128xbf16>, vector<8x128xf32> -> vector<8x128xf32>
    %c0_3 = arith.constant 0 : index
    %c0_4 = arith.constant 0 : index
    %4 = vector.load %arg3[%c0_3, %c0_4] : memref<1x128xf32, #tpu.memory_space<vmem>>, vector<1x128xf32>
    %5 = vector.broadcast %4 : vector<1x128xf32> to vector<8x128xf32>
    %6 = arith.addf %3, %5 : vector<8x128xf32>
    %cst_5 = arith.constant 0.000000e+00 : f32
    %7 = vector.broadcast %cst_5 : f32 to vector<8x128xf32>
    %8 = arith.maximumf %6, %7 : vector<8x128xf32>
    %9 = arith.truncf %8 : vector<8x128xf32> to vector<8x128xbf16>
    %c0_6 = arith.constant 0 : index
    %c0_7 = arith.constant 0 : index
    %10 = vector.load %arg4[%c0_6, %c0_7] : memref<128x256xbf16, #tpu.memory_space<vmem>>, vector<128x256xbf16>
    %cst_8 = arith.constant dense<0.000000e+00> : vector<8x256xf32>
    %11 = tpu.matmul %9, %10, %cst_8 {dimension_numbers = #tpu.dot_dimension_numbers<[1], [0], [0], [1], [0, 0, 1, 1], [], []>} : vector<8x128xbf16>, vector<128x256xbf16>, vector<8x256xf32> -> vector<8x256xf32>
    %c0_9 = arith.constant 0 : index
    %c0_10 = arith.constant 0 : index
    %12 = vector.load %arg5[%c0_9, %c0_10] : memref<1x256xf32, #tpu.memory_space<vmem>>, vector<1x256xf32>
    %13 = vector.broadcast %12 : vector<1x256xf32> to vector<8x256xf32>
    %14 = arith.addf %11, %13 : vector<8x256xf32>
    %cst_11 = arith.constant 0.000000e+00 : f32
    %15 = vector.broadcast %cst_11 : f32 to vector<8x256xf32>
    %16 = arith.maximumf %14, %15 : vector<8x256xf32>
    %17 = arith.truncf %16 : vector<8x256xf32> to vector<8x256xbf16>
    %c0_12 = arith.constant 0 : index
    %c0_13 = arith.constant 0 : index
    %18 = vector.load %arg6[%c0_12, %c0_13] : memref<256x16xbf16, #tpu.memory_space<vmem>>, vector<256x16xbf16>
    %cst_14 = arith.constant dense<0.000000e+00> : vector<8x16xf32>
    %19 = tpu.matmul %17, %18, %cst_14 {dimension_numbers = #tpu.dot_dimension_numbers<[1], [0], [0], [1], [0, 0, 1, 1], [], []>} : vector<8x256xbf16>, vector<256x16xbf16>, vector<8x16xf32> -> vector<8x16xf32>
    %c0_15 = arith.constant 0 : index
    %c0_16 = arith.constant 0 : index
    %20 = vector.load %arg7[%c0_15, %c0_16] : memref<1x16xf32, #tpu.memory_space<vmem>>, vector<1x16xf32>
    %21 = vector.broadcast %20 : vector<1x16xf32> to vector<8x16xf32>
    %22 = arith.addf %19, %21 : vector<8x16xf32>
    %c0_17 = arith.constant 0 : index
    %c0_18 = arith.constant 0 : index
    %23 = vector.load %arg8[%c0_17, %c0_18] : memref<8x16xf32, #tpu.memory_space<vmem>>, vector<8x16xf32>
    tpu.vector_store %arg8[%c0_17, %c0_18], %22 {strides = array<i32>} : memref<8x16xf32, #tpu.memory_space<vmem>>, vector<8x16xf32>,
    return
  }
  func.func @transform_0(%arg0: i32) -> (i32, i32) {
    %c0_i32 = arith.constant 0 : i32
    %c0_i32_0 = arith.constant 0 : i32
    return %arg0, %c0_i32 : i32, i32
  }
  func.func @transform_1(%arg0: i32) -> (i32, i32) {
    %c0_i32 = arith.constant 0 : i32
    %c0_i32_0 = arith.constant 0 : i32
    %c0_i32_1 = arith.constant 0 : i32
    return %c0_i32, %c0_i32_0 : i32, i32
  }
  func.func @transform_2(%arg0: i32) -> (i32, i32) {
    %c0_i32 = arith.constant 0 : i32
    %c0_i32_0 = arith.constant 0 : i32
    %c0_i32_1 = arith.constant 0 : i32
    return %c0_i32, %c0_i32_0 : i32, i32
  }
  func.func @transform_3(%arg0: i32) -> (i32, i32) {
    %c0_i32 = arith.constant 0 : i32
    %c0_i32_0 = arith.constant 0 : i32
    %c0_i32_1 = arith.constant 0 : i32
    return %c0_i32, %c0_i32_0 : i32, i32
  }
  func.func @transform_4(%arg0: i32) -> (i32, i32) {
    %c0_i32 = arith.constant 0 : i32
    %c0_i32_0 = arith.constant 0 : i32
    %c0_i32_1 = arith.constant 0 : i32
    return %c0_i32, %c0_i32_0 : i32, i32
  }
  func.func @transform_5(%arg0: i32) -> (i32, i32) {
    %c0_i32 = arith.constant 0 : i32
    %c0_i32_0 = arith.constant 0 : i32
    %c0_i32_1 = arith.constant 0 : i32
    return %c0_i32, %c0_i32_0 : i32, i32
  }
  func.func @transform_6(%arg0: i32) -> (i32, i32) {
    %c0_i32 = arith.constant 0 : i32
    %c0_i32_0 = arith.constant 0 : i32
    %c0_i32_1 = arith.constant 0 : i32
    return %c0_i32, %c0_i32_0 : i32, i32
  }
  func.func @transform_7(%arg0: i32) -> (i32, i32) {
    %c0_i32 = arith.constant 0 : i32
    %c0_i32_0 = arith.constant 0 : i32
    return %arg0, %c0_i32 : i32, i32
  }
}

</mosaic_0001>

<llo_original>
// kernel: tpu_custom_call.1
$region0: #{tpu_custom_call.1}
  #allocation0 [shape = 'u32[]', space=smem, size = 0x4, offset = 0x4, fixed_abs, tag = 'smem constant byte address 0x4 - core index']
  #allocation1 [shape = 'u32[144,128]{1,0:T(1,128)}', space=vmem, size = 0x12000, scoped, tag = 'internal scratch']
  %s0 = inlined_call_operand.hbm [shape: f32[8,32], index: 0, kind: input, shape index: {}]
  %s1 = inlined_call_operand.vmem [shape: bf16[32,128], index: 1, kind: input, shape index: {}]
  %s2 = inlined_call_operand.hbm [shape: f32[1,128], index: 2, kind: input, shape index: {}]
  %s3 = inlined_call_operand.vmem [shape: bf16[128,256], index: 3, kind: input, shape index: {}]
  %s4 = inlined_call_operand.vmem [shape: f32[1,256], index: 4, kind: input, shape index: {}]
  %s5 = inlined_call_operand.vmem [shape: bf16[256,16], index: 5, kind: input, shape index: {}]
  %s6 = inlined_call_operand.vmem [shape: f32[1,16], index: 6, kind: input, shape index: {}]
  %s7 = inlined_call_operand.hbm [shape: f32[8,16], index: 7, kind: output, shape index: {}]
  %s8 = sld [smem:[#allocation0]]
  $region46: #{tpu_custom_call.1} parent=0
    _
  %s10 = ssub.s32 1, %s8
  %s11 = scalar_select 0, %s10, %s8
  $region1: #{tpu_custom_call.1} parent=0
    #allocation2 [shape = 'u8[4096]{0}', space=vmem, size = 0x1000, scoped, tag = 'input window, operand 0, single buffered']
    #allocation3 [shape = 's32[1]{0}', space=sflag, size = 0x4, scoped, tag = 'scoped memory for tpu_custom_call.1']
    #allocation4 [shape = 's32[1]{0}', space=sflag, size = 0x4, scoped, tag = 'scoped memory for tpu_custom_call.1']
    #allocation5 [shape = 'u8[512]{0}', space=vmem, size = 0x400, scoped, tag = 'input window, operand 2, single buffered']
    #allocation6 [shape = 's32[1]{0}', space=sflag, size = 0x4, scoped, tag = 'scoped memory for tpu_custom_call.1']
    #allocation7 [shape = 'u8[4096]{0}', space=vmem, size = 0x1000, scoped, tag = 'output window, operand 0, single buffered']
    %12 = vsyncpa [#allocation3], 0
    %13 = vsyncpa [#allocation6], 0
    %14 = vsyncpa [#allocation4], 0
    // Predicated region
    $region2: #{tpu_custom_call.1} parent=1 // pred_check
      _
    $region3: #{tpu_custom_call.1} parent=1 // pred_check_branch
      %16 = sbr.rel (0) target = $region5
    $region4: #{tpu_custom_call.1} parent=1 // pred_region
      %s18 = ssub.s32 128, 128
      %19 = vsyncadd [#allocation3], %s18
      %s21 = sshll.u32 [#allocation2], 4
      %s22 = int_to_ptr.vmem [resolvable:$true] %s21
      %24 = dma.hbm_to_vmem [thread:$0]  %s0, 128, %s22, [#allocation3]
    $region5: #{tpu_custom_call.1} parent=1 // pred_fallthru
      _
    // Predicated region
    $region6: #{tpu_custom_call.1} parent=1 // pred_check
      _
    $region7: #{tpu_custom_call.1} parent=1 // pred_check_branch
      %26 = sbr.rel (0) target = $region9
    $region8: #{tpu_custom_call.1} parent=1 // pred_region
      _
    $region9: #{tpu_custom_call.1} parent=1 // pred_fallthru
      _
    // Predicated region
    $region10: #{tpu_custom_call.1} parent=1 // pred_check
      _
    $region11: #{tpu_custom_call.1} parent=1 // pred_check_branch
      %28 = sbr.rel (0) target = $region13
    $region12: #{tpu_custom_call.1} parent=1 // pred_region
      %s30 = ssub.s32 16, 16
      %31 = vsyncadd [#allocation6], %s30
      %s33 = sshll.u32 [#allocation5], 4
      %s34 = int_to_ptr.vmem [resolvable:$true] %s33
      %36 = dma.hbm_to_vmem [thread:$0]  %s2, 16, %s34, [#allocation6]
    $region13: #{tpu_custom_call.1} parent=1 // pred_fallthru
      _
    // Predicated region
    $region14: #{tpu_custom_call.1} parent=1 // pred_check
      _
    $region15: #{tpu_custom_call.1} parent=1 // pred_check_branch
      %38 = sbr.rel (0) target = $region17
    $region16: #{tpu_custom_call.1} parent=1 // pred_region
      _
    $region17: #{tpu_custom_call.1} parent=1 // pred_fallthru
      _
    // Predicated region
    $region18: #{tpu_custom_call.1} parent=1 // pred_check
      _
    $region19: #{tpu_custom_call.1} parent=1 // pred_check_branch
      %40 = sbr.rel (0) target = $region21
    $region20: #{tpu_custom_call.1} parent=1 // pred_region
      _
    $region21: #{tpu_custom_call.1} parent=1 // pred_fallthru
      _
    // Predicated region
    $region22: #{tpu_custom_call.1} parent=1 // pred_check
      _
    $region23: #{tpu_custom_call.1} parent=1 // pred_check_branch
      %42 = sbr.rel (0) target = $region25
    $region24: #{tpu_custom_call.1} parent=1 // pred_region
      _
    $region25: #{tpu_custom_call.1} parent=1 // pred_fallthru
      _
    // Predicated region
    $region26: #{tpu_custom_call.1} parent=1 // pred_check
      _
    $region27: #{tpu_custom_call.1} parent=1 // pred_check_branch
      %44 = sbr.rel (0) target = $region29
    $region28: #{tpu_custom_call.1} parent=1 // pred_region
      _
    $region29: #{tpu_custom_call.1} parent=1 // pred_fallthru
      _
    // Predicated region
    $region30: #{tpu_custom_call.1} parent=1 // pred_check
      _
    $region31: #{tpu_custom_call.1} parent=1 // pred_check_branch
      %46 = sbr.rel (0) target = $region33
    $region32: #{tpu_custom_call.1} parent=1 // pred_region
      %47 = dma.done [#allocation3], 128
    $region33: #{tpu_custom_call.1} parent=1 // pred_fallthru
      _
    // Predicated region
    $region34: #{tpu_custom_call.1} parent=1 // pred_check
      _
    $region35: #{tpu_custom_call.1} parent=1 // pred_check_branch
      %49 = sbr.rel (0) target = $region37
    $region36: #{tpu_custom_call.1} parent=1 // pred_region
      %50 = dma.done [#allocation6], 16
    $region37: #{tpu_custom_call.1} parent=1 // pred_fallthru
      _
    %v52 = vld [vmem:[#allocation2] sm:$0xff]
    %v53 = vpack.c.bf16 %v52, %v52
    %v54 = vld [vmem:[%s1] sm:$0xf]
    %v55 = vld [vmem:[%s1 + $0x4] sm:$0xf]
    %v56 = vld [vmem:[%s1 + $0x8] sm:$0xf]
    %v57 = vld [vmem:[%s1 + $0xc] sm:$0xf]
    %v58 = vld [vmem:[#allocation5] sm:$0x1]
    %v60 = vlaneseq
    %v61 = vshrl.u32 %v60, 7
    %v62 = vsub.s32 0, %v61
    %v63 = vrot.slane %v58, %v62
    %v69 = vunpack.c.l.b16 %v54
    %v70 = vunpack.c.l.b16 %v55
    %v71 = vunpack.c.l.b16 %v56
    %v72 = vunpack.c.l.b16 %v57
    %v73 = vpack.c.b16 %v70, %v69
    %v74 = vpack.c.b16 %v72, %v71
    %vm77 = vcmask 261120
    %v79 = vsel %vm77, %v53, 0
    %81 = vmatprep.subr.bf16.mxu0 0
    %82 = vmatpush1.bf16.msra.mxu0 %v73
    %83 = vmatprep.subr.bf16.mxu0 0
    %84 = vmatpush1.bf16.msra.mxu0 %v74
    %85 = vmatprep.subr.bf16.mxu0 0
    %86 = vmatpush1.bf16.msra.mxu0 0
    %87 = vmatprep.subr.bf16.mxu0 0
    %88 = vmatpush1.bf16.msra.mxu0 0
    %89 = vmatprep.subr.bf16.mxu0 0
    %90 = vmatpush1.bf16.msra.mxu0 0
    %91 = vmatprep.subr.bf16.mxu0 0
    %92 = vmatpush1.bf16.msra.mxu0 0
    %93 = vmatprep.subr.bf16.mxu0 0
    %94 = vmatpush1.bf16.msra.mxu0 0
    %95 = vmatprep.subr.bf16.mxu0 0
    %96 = vmatpush1.bf16.msra.mxu0 0
    %97 = vmatprep.subr.bf16.mxu0 0
    %98 = vmatpush1.bf16.msra.mxu0 0
    %99 = vmatprep.subr.bf16.mxu0 0
    %100 = vmatpush1.bf16.msra.mxu0 0
    %101 = vmatprep.subr.bf16.mxu0 0
    %102 = vmatpush1.bf16.msra.mxu0 0
    %103 = vmatprep.subr.bf16.mxu0 0
    %104 = vmatpush1.bf16.msra.mxu0 0
    %105 = vmatprep.subr.bf16.mxu0 0
    %106 = vmatpush1.bf16.msra.mxu0 0
    %107 = vmatprep.subr.bf16.mxu0 0
    %108 = vmatpush1.bf16.msra.mxu0 0
    %109 = vmatprep.subr.bf16.mxu0 0
    %110 = vmatpush1.bf16.msra.mxu0 0
    %111 = vmatprep.subr.bf16.mxu0 0
    %112 = vmatpush1.bf16.msra.mxu0 0
    %113 = vmatprep.mubr.bf16.mxu0 0
    %114 = vmatmul.mubr.bf16.gmra.mrb[0].mxu0 %v79
    %v115 = vpop.f32.mrb[0].mxu0
    %v116 = vadd.f32 %v63, %v115
    %v117 = vpop.f32.mrb[0].mxu0
    %v118 = vpop.f32.mrb[0].mxu0
    %v119 = vpop.f32.mrb[0].mxu0
    %120 = vdwg.mxu0
    %v121 = vmax.f32 %v116, 0.0
    %v122 = vpack.c.bf16 %v121, %v121
    %v123 = vld [vmem:[%s3] sm:$0xff]
    %v124 = vld [vmem:[%s3 + $0x8] sm:$0xff]
    %v125 = vld [vmem:[%s3 + $0x10] sm:$0xff]
    %v126 = vld [vmem:[%s3 + $0x18] sm:$0xff]
    %v127 = vld [vmem:[%s3 + $0x20] sm:$0xff]
    %v128 = vld [vmem:[%s3 + $0x28] sm:$0xff]
    %v129 = vld [vmem:[%s3 + $0x30] sm:$0xff]
    %v130 = vld [vmem:[%s3 + $0x38] sm:$0xff]
    %v131 = vld [vmem:[%s3 + $0x40] sm:$0xff]
    %v132 = vld [vmem:[%s3 + $0x48] sm:$0xff]
    %v133 = vld [vmem:[%s3 + $0x50] sm:$0xff]
    %v134 = vld [vmem:[%s3 + $0x58] sm:$0xff]
    %v135 = vld [vmem:[%s3 + $0x60] sm:$0xff]
    %v136 = vld [vmem:[%s3 + $0x68] sm:$0xff]
    %v137 = vld [vmem:[%s3 + $0x70] sm:$0xff]
    %v138 = vld [vmem:[%s3 + $0x78] sm:$0xff]
    %v139 = vld [vmem:[%s4] sm:$0x3]
    %v141 = vlaneseq
    %v142 = vshrl.u32 %v141, 7
    %v143 = vsub.s32 0, %v142
    %v144 = vrot.slane %v139, %v143
    %v145 = vlaneseq
    %v146 = vshrl.u32 %v145, 7
    %v147 = vsub.s32 1, %v146
    %v148 = vrot.slane %v139, %v147
    %v167 = vunpack.c.l.b16 %v123
    %v168 = vunpack.c.h.b16 %v123
    %v169 = vunpack.c.l.b16 %v124
    %v170 = vunpack.c.h.b16 %v124
    %v171 = vunpack.c.l.b16 %v125
    %v172 = vunpack.c.h.b16 %v125
    %v173 = vunpack.c.l.b16 %v126
    %v174 = vunpack.c.h.b16 %v126
    %v175 = vunpack.c.l.b16 %v127
    %v176 = vunpack.c.h.b16 %v127
    %v177 = vunpack.c.l.b16 %v128
    %v178 = vunpack.c.h.b16 %v128
    %v179 = vunpack.c.l.b16 %v129
    %v180 = vunpack.c.h.b16 %v129
    %v181 = vunpack.c.l.b16 %v130
    %v182 = vunpack.c.h.b16 %v130
    %v183 = vunpack.c.l.b16 %v131
    %v184 = vunpack.c.h.b16 %v131
    %v185 = vunpack.c.l.b16 %v132
    %v186 = vunpack.c.h.b16 %v132
    %v187 = vunpack.c.l.b16 %v133
    %v188 = vunpack.c.h.b16 %v133
    %v189 = vunpack.c.l.b16 %v134
    %v190 = vunpack.c.h.b16 %v134
    %v191 = vunpack.c.l.b16 %v135
    %v192 = vunpack.c.h.b16 %v135
    %v193 = vunpack.c.l.b16 %v136
    %v194 = vunpack.c.h.b16 %v136
    %v195 = vunpack.c.l.b16 %v137
    %v196 = vunpack.c.h.b16 %v137
    %v197 = vunpack.c.l.b16 %v138
    %v198 = vunpack.c.h.b16 %v138
    %v199 = vpack.c.b16 %v169, %v167
    %v200 = vpack.c.b16 %v170, %v168
    %v201 = vpack.c.b16 %v173, %v171
    %v202 = vpack.c.b16 %v174, %v172
    %v203 = vpack.c.b16 %v177, %v175
    %v204 = vpack.c.b16 %v178, %v176
    %v205 = vpack.c.b16 %v181, %v179
    %v206 = vpack.c.b16 %v182, %v180
    %v207 = vpack.c.b16 %v185, %v183
    %v208 = vpack.c.b16 %v186, %v184
    %v209 = vpack.c.b16 %v189, %v187
    %v210 = vpack.c.b16 %v190, %v188
    %v211 = vpack.c.b16 %v193, %v191
    %v212 = vpack.c.b16 %v194, %v192
    %v213 = vpack.c.b16 %v197, %v195
    %v214 = vpack.c.b16 %v198, %v196
    %231 = vmatprep.subr.bf16.mxu0 %v200
    %232 = vmatpush1.bf16.msra.mxu0 %v199
    %233 = vmatprep.subr.bf16.mxu0 %v202
    %234 = vmatpush1.bf16.msra.mxu0 %v201
    %235 = vmatprep.subr.bf16.mxu0 %v204
    %236 = vmatpush1.bf16.msra.mxu0 %v203
    %237 = vmatprep.subr.bf16.mxu0 %v206
    %238 = vmatpush1.bf16.msra.mxu0 %v205
    %239 = vmatprep.subr.bf16.mxu0 %v208
    %240 = vmatpush1.bf16.msra.mxu0 %v207
    %241 = vmatprep.subr.bf16.mxu0 %v210
    %242 = vmatpush1.bf16.msra.mxu0 %v209
    %243 = vmatprep.subr.bf16.mxu0 %v212
    %244 = vmatpush1.bf16.msra.mxu0 %v211
    %245 = vmatprep.subr.bf16.mxu0 %v214
    %246 = vmatpush1.bf16.msra.mxu0 %v213
    %247 = vmatprep.subr.bf16.mxu0 0
    %248 = vmatpush1.bf16.msra.mxu0 0
    %249 = vmatprep.subr.bf16.mxu0 0
    %250 = vmatpush1.bf16.msra.mxu0 0
    %251 = vmatprep.subr.bf16.mxu0 0
    %252 = vmatpush1.bf16.msra.mxu0 0
    %253 = vmatprep.subr.bf16.mxu0 0
    %254 = vmatpush1.bf16.msra.mxu0 0
    %255 = vmatprep.subr.bf16.mxu0 0
    %256 = vmatpush1.bf16.msra.mxu0 0
    %257 = vmatprep.subr.bf16.mxu0 0
    %258 = vmatpush1.bf16.msra.mxu0 0
    %259 = vmatprep.subr.bf16.mxu0 0
    %260 = vmatpush1.bf16.msra.mxu0 0
    %261 = vmatprep.subr.bf16.mxu0 0
    %262 = vmatpush1.bf16.msra.mxu0 0
    %263 = vmatprep.mubr.bf16.mxu0 0
    %264 = vmatmul.mubr.bf16.gmra.mrb[0].mxu0 %v122
    %v265 = vpop.f32.mrb[0].mxu0
    %v266 = vadd.f32 %v144, %v265
    %v267 = vpop.f32.mrb[0].mxu0
    %v268 = vadd.f32 %v148, %v267
    %v269 = vpop.f32.mrb[0].mxu0
    %v270 = vpop.f32.mrb[0].mxu0
    %271 = vdwg.mxu0
    %v272 = vmax.f32 %v266, 0.0
    %v273 = vmax.f32 %v268, 0.0
    %v274 = vpack.c.bf16 %v272, %v272
    %v275 = vpack.c.bf16 %v273, %v273
    %v276 = vld [vmem:[%s5] sm:$0xf]
    %v277 = vld [vmem:[%s5 + $0x4] sm:$0xf]
    %v278 = vld [vmem:[%s5 + $0x8] sm:$0xf]
    %v279 = vld [vmem:[%s5 + $0xc] sm:$0xf]
    %v280 = vld [vmem:[%s5 + $0x10] sm:$0xf]
    %v281 = vld [vmem:[%s5 + $0x14] sm:$0xf]
    %v282 = vld [vmem:[%s5 + $0x18] sm:$0xf]
    %v283 = vld [vmem:[%s5 + $0x1c] sm:$0xf]
    %v284 = vld [vmem:[%s5 + $0x20] sm:$0xf]
    %v285 = vld [vmem:[%s5 + $0x24] sm:$0xf]
    %v286 = vld [vmem:[%s5 + $0x28] sm:$0xf]
    %v287 = vld [vmem:[%s5 + $0x2c] sm:$0xf]
    %v288 = vld [vmem:[%s5 + $0x30] sm:$0xf]
    %v289 = vld [vmem:[%s5 + $0x34] sm:$0xf]
    %v290 = vld [vmem:[%s5 + $0x38] sm:$0xf]
    %v291 = vld [vmem:[%s5 + $0x3c] sm:$0xf]
    %v292 = vld [vmem:[%s5 + $0x40] sm:$0xf]
    %v293 = vld [vmem:[%s5 + $0x44] sm:$0xf]
    %v294 = vld [vmem:[%s5 + $0x48] sm:$0xf]
    %v295 = vld [vmem:[%s5 + $0x4c] sm:$0xf]
    %v296 = vld [vmem:[%s5 + $0x50] sm:$0xf]
    %v297 = vld [vmem:[%s5 + $0x54] sm:$0xf]
    %v298 = vld [vmem:[%s5 + $0x58] sm:$0xf]
    %v299 = vld [vmem:[%s5 + $0x5c] sm:$0xf]
    %v300 = vld [vmem:[%s5 + $0x60] sm:$0xf]
    %v301 = vld [vmem:[%s5 + $0x64] sm:$0xf]
    %v302 = vld [vmem:[%s5 + $0x68] sm:$0xf]
    %v303 = vld [vmem:[%s5 + $0x6c] sm:$0xf]
    %v304 = vld [vmem:[%s5 + $0x70] sm:$0xf]
    %v305 = vld [vmem:[%s5 + $0x74] sm:$0xf]
    %v306 = vld [vmem:[%s5 + $0x78] sm:$0xf]
    %v307 = vld [vmem:[%s5 + $0x7c] sm:$0xf]
    %v308 = vld [vmem:[%s6] sm:$0x1]
    %v310 = vlaneseq
    %v311 = vshrl.u32 %v310, 7
    %v312 = vsub.s32 0, %v311
    %v313 = vrot.slane %v308, %v312
    %v347 = vunpack.c.l.b16 %v276
    %v348 = vunpack.c.l.b16 %v277
    %v349 = vunpack.c.l.b16 %v278
    %v350 = vunpack.c.l.b16 %v279
    %v351 = vunpack.c.l.b16 %v280
    %v352 = vunpack.c.l.b16 %v281
    %v353 = vunpack.c.l.b16 %v282
    %v354 = vunpack.c.l.b16 %v283
    %v355 = vunpack.c.l.b16 %v284
    %v356 = vunpack.c.l.b16 %v285
    %v357 = vunpack.c.l.b16 %v286
    %v358 = vunpack.c.l.b16 %v287
    %v359 = vunpack.c.l.b16 %v288
    %v360 = vunpack.c.l.b16 %v289
    %v361 = vunpack.c.l.b16 %v290
    %v362 = vunpack.c.l.b16 %v291
    %v363 = vunpack.c.l.b16 %v292
    %v364 = vunpack.c.l.b16 %v293
    %v365 = vunpack.c.l.b16 %v294
    %v366 = vunpack.c.l.b16 %v295
    %v367 = vunpack.c.l.b16 %v296
    %v368 = vunpack.c.l.b16 %v297
    %v369 = vunpack.c.l.b16 %v298
    %v370 = vunpack.c.l.b16 %v299
    %v371 = vunpack.c.l.b16 %v300
    %v372 = vunpack.c.l.b16 %v301
    %v373 = vunpack.c.l.b16 %v302
    %v374 = vunpack.c.l.b16 %v303
    %v375 = vunpack.c.l.b16 %v304
    %v376 = vunpack.c.l.b16 %v305
    %v377 = vunpack.c.l.b16 %v306
    %v378 = vunpack.c.l.b16 %v307
    %v379 = vpack.c.b16 %v348, %v347
    %v380 = vpack.c.b16 %v350, %v349
    %v381 = vpack.c.b16 %v352, %v351
    %v382 = vpack.c.b16 %v354, %v353
    %v383 = vpack.c.b16 %v356, %v355
    %v384 = vpack.c.b16 %v358, %v357
    %v385 = vpack.c.b16 %v360, %v359
    %v386 = vpack.c.b16 %v362, %v361
    %v387 = vpack.c.b16 %v364, %v363
    %v388 = vpack.c.b16 %v366, %v365
    %v389 = vpack.c.b16 %v368, %v367
    %v390 = vpack.c.b16 %v370, %v369
    %v391 = vpack.c.b16 %v372, %v371
    %v392 = vpack.c.b16 %v374, %v373
    %v393 = vpack.c.b16 %v376, %v375
    %v394 = vpack.c.b16 %v378, %v377
    %411 = vmatprep.subr.bf16.mxu0 0
    %412 = vmatpush1.bf16.msra.mxu0 %v379
    %413 = vmatprep.subr.bf16.mxu0 0
    %414 = vmatpush1.bf16.msra.mxu0 %v380
    %415 = vmatprep.subr.bf16.mxu0 0
    %416 = vmatpush1.bf16.msra.mxu0 %v381
    %417 = vmatprep.subr.bf16.mxu0 0
    %418 = vmatpush1.bf16.msra.mxu0 %v382
    %419 = vmatprep.subr.bf16.mxu0 0
    %420 = vmatpush1.bf16.msra.mxu0 %v383
    %421 = vmatprep.subr.bf16.mxu0 0
    %422 = vmatpush1.bf16.msra.mxu0 %v384
    %423 = vmatprep.subr.bf16.mxu0 0
    %424 = vmatpush1.bf16.msra.mxu0 %v385
    %425 = vmatprep.subr.bf16.mxu0 0
    %426 = vmatpush1.bf16.msra.mxu0 %v386
    %427 = vmatprep.subr.bf16.mxu0 0
    %428 = vmatpush1.bf16.msra.mxu0 %v387
    %429 = vmatprep.subr.bf16.mxu0 0
    %430 = vmatpush1.bf16.msra.mxu0 %v388
    %431 = vmatprep.subr.bf16.mxu0 0
    %432 = vmatpush1.bf16.msra.mxu0 %v389
    %433 = vmatprep.subr.bf16.mxu0 0
    %434 = vmatpush1.bf16.msra.mxu0 %v390
    %435 = vmatprep.subr.bf16.mxu0 0
    %436 = vmatpush1.bf16.msra.mxu0 %v391
    %437 = vmatprep.subr.bf16.mxu0 0
    %438 = vmatpush1.bf16.msra.mxu0 %v392
    %439 = vmatprep.subr.bf16.mxu0 0
    %440 = vmatpush1.bf16.msra.mxu0 %v393
    %441 = vmatprep.subr.bf16.mxu0 0
    %442 = vmatpush1.bf16.msra.mxu0 %v394
    %443 = vmatprep.mubr.bf16.mxu0 %v275
    %444 = vmatmul.mubr.bf16.gmra.mrb[0].mxu0 %v274
    %v445 = vpop.f32.mrb[0].mxu0
    %v446 = vadd.f32 %v313, %v445
    %v447 = vpop.f32.mrb[0].mxu0
    %v448 = vpop.f32.mrb[0].mxu0
    %v449 = vpop.f32.mrb[0].mxu0
    %450 = vdwg.mxu0
    %vm451 = vcmask 130048
    %452 = vst.msk [vmem:[#allocation7] sm:$0xff] %vm451, %v446
    // Predicated region
    $region38: #{tpu_custom_call.1} parent=1 // pred_check
      _
    $region39: #{tpu_custom_call.1} parent=1 // pred_check_branch
      %454 = sbr.rel (0) target = $region41
    $region40: #{tpu_custom_call.1} parent=1 // pred_region
      %s456 = ssub.s32 128, 128
      %457 = vsyncadd [#allocation4], %s456
      %s459 = sshll.u32 [#allocation7], 4
      %s460 = int_to_ptr.vmem [resolvable:$true] %s459
      %462 = dma.vmem_to_hbm [thread:$0]  %s460, 128, %s7, [#allocation4]
    $region41: #{tpu_custom_call.1} parent=1 // pred_fallthru
      _
    // Predicated region
    $region42: #{tpu_custom_call.1} parent=1 // pred_check
      _
    $region43: #{tpu_custom_call.1} parent=1 // pred_check_branch
      %464 = sbr.rel (0) target = $region45
    $region44: #{tpu_custom_call.1} parent=1 // pred_region
      %465 = dma.done [#allocation4], 128
    $region45: #{tpu_custom_call.1} parent=1 // pred_fallthru
      _
    %466 = vsyncpa [#allocation3], 1
    %467 = vsyncpa [#allocation6], 1
    %468 = vsyncpa [#allocation4], 1

</llo_original>
